<compile_context>
chip_gen: v6e
topology: v6e:2x2x1
jax: 0.10.0
libtpu: 0.0.40
codegen_flags: <defaults>
</compile_context>

<pallas_src>
import functools

import jax
import jax.numpy as jnp
from jax.experimental import pallas as pl
from jax.experimental.pallas import tpu as pltpu


# ------------------------------ kernel helpers -------------------------------

def _rmsnorm(x, w, eps):
    # x: (TL, C) f32, w: (1, C) f32 learnable scale; normalize over last axis.
    ms = jnp.mean(x * x, axis=-1, keepdims=True)
    return x * jax.lax.rsqrt(ms + eps) * w


# ----------------------- weights-resident kernel (1-D grid) -------------------

def ff_resident_kernel(x_ref, nw_ref, w1_ref, b1_ref, w2_ref, b2_ref, o_ref,
                       *, eps):
    # grid = (M // TL,); w1/w2/biases have constant index maps -> DMA'd once.
    x = x_ref[...].astype(jnp.float32)                              # (TL, C)
    xn = _rmsnorm(x, nw_ref[...].astype(jnp.float32), eps).astype(jnp.bfloat16)
    h = jnp.dot(xn, w1_ref[...], preferred_element_type=jnp.float32)
    h = h + b1_ref[...].astype(jnp.float32)
    # TODO(synk): 'default' activation mapped to tanh-approx GELU; PyTorch
    # nn.GELU() default is exact erf (~1e-3 numeric difference).
    h = jax.nn.gelu(h, approximate=True)
    out = jnp.dot(h.astype(jnp.bfloat16), w2_ref[...],
                  preferred_element_type=jnp.float32)
    o_ref[...] = (x + out + b2_ref[...].astype(jnp.float32)).astype(o_ref.dtype)


# ----------------------- hidden-streaming kernel (2-D grid) -------------------

def ff_stream_kernel(x_ref, nw_ref, w1_ref, b1_ref, w2_ref, b2_ref,
                     o_ref, xn_ref, acc_ref, *, eps):
    # grid = (M // TL, H // TH); hidden axis is innermost ("arbitrary").
    hk = pl.program_id(1)

    @pl.when(hk == 0)
    def _():
        # Normalize once per sequence tile, cast once to bf16 for the MXU.
        x = x_ref[...].astype(jnp.float32)                          # (TL, C)
        xn_ref[...] = _rmsnorm(x, nw_ref[...].astype(jnp.float32),
                               eps).astype(jnp.bfloat16)
        acc_ref[...] = jnp.zeros_like(acc_ref)

    # First projection slice: (TL, C) @ (C, TH), f32 MXU accumulation.
    h = jnp.dot(xn_ref[...], w1_ref[...], preferred_element_type=jnp.float32)
    h = h + b1_ref[...].astype(jnp.float32)
    h = jax.nn.gelu(h, approximate=True)

    # Second projection slice: (TL, TH) @ (TH, C), accumulated over TH tiles.
    acc_ref[...] += jnp.dot(h.astype(jnp.bfloat16), w2_ref[...],
                            preferred_element_type=jnp.float32)

    @pl.when(hk == pl.num_programs(1) - 1)
    def _():
        x = x_ref[...].astype(jnp.float32)
        o_ref[...] = (x + acc_ref[...] +
                      b2_ref[...].astype(jnp.float32)).astype(o_ref.dtype)
    # TODO(synk): dropout inside FeedForward omitted (inference / dropout=0.0).


# ------------------------------ tiling / budget --------------------------------

def _tile_candidates(total, mults=(256, 128, 16, 8)):
    """Divisors of `total` that are multiples of 256/128/16/8, descending."""
    cands = set()
    for m in mults:
        t = m
        while t <= total:
            if total % t == 0:
                cands.add(t)
            t += m
    if not cands:
        cands.add(total)
    return sorted(cands, reverse=True)


def _resident_vmem_bytes(tl, c, h, xb, wb):
    b = 0
    b += 2 * tl * c * xb            # x tile (double-buffered)
    b += 2 * tl * c * xb            # out tile (double-buffered)
    b += 2 * (c * 4 + c * 4)        # norm weight + b2 (f32)
    b += 2 * c * h * wb             # w1 (resident block, 2 buffers)
    b += 2 * h * c * wb             # w2 (resident block, 2 buffers)
    b += 2 * h * 4                  # b1
    b += tl * h * 6                 # transient hidden activations (f32 + bf16)
    b += tl * c * 6                 # transient xn / residual temporaries
    return b


def _stream_vmem_bytes(tl, th, c, h, xb, wb):
    b = 0
    b += 2 * tl * c * xb            # x tile
    b += 2 * tl * c * xb            # out tile
    b += 2 * (c * 4 + c * 4)        # norm weight + b2
    b += 2 * c * th * wb            # w1 slice
    b += 2 * th * c * wb            # w2 slice
    b += 2 * th * 4                 # b1 slice
    b += tl * c * (2 + 4)           # xn (bf16) + acc (f32) scratch
    b += tl * th * 6                # transient hidden slice (f32 + bf16)
    return b


def _vmem_limit_bytes(actual, vmem_cap):
    lim = max(actual + (8 << 20), 32 << 20)       # actual usage + headroom
    lim = min(lim, vmem_cap - (8 << 20))          # always leave HW headroom
    return int(max(lim, 16 << 20))


# ------------------------------- python wrapper -------------------------------

def feedforward_block(x, params, *, eps=1e-6, force_stream=False,
                      tl_target=None, th_target=None):
    B, L, C = x.shape
    H = params["w1"].shape[1]
    M = B * L
    x2 = x.reshape(M, C)            # flatten (B, L) -> one parallel grid axis

    xb = jnp.dtype(x.dtype).itemsize
    wb = jnp.dtype(params["w1"].dtype).itemsize

    try:
        vmem_cap = int(pltpu.get_tpu_info().vmem_capacity_bytes)
    except Exception:
        vmem_cap = 128 << 20

    if vmem_cap <= (64 << 20):
        # v7x-class: do NOT request all of VMEM; leave room for internal scratch.
        budget = min(vmem_cap - (12 << 20), 52 << 20)
        tl_def, th_def = 512, 512
    else:
        # v5e/v6e: 128 MiB physical -> use it (bigger TL = higher arithmetic
        # intensity on the weight stream).
        budget = min(vmem_cap - (24 << 20), 104 << 20)
        tl_def, th_def = 1024, 512
    tl_target = tl_def if tl_target is None else tl_target
    th_target = th_def if th_target is None else th_target

    tl_cands = _tile_candidates(M)

    args = (x2, params["norm_w"], params["w1"], params["b1"],
            params["w2"], params["b2"])

    # ---------------- weights-resident fast path ----------------
    if not force_stream:
        for TL in tl_cands:
            if TL > tl_target:
                continue
            need = _resident_vmem_bytes(TL, C, H, xb, wb)
            if need > budget:
                continue
            out2 = pl.pallas_call(
                functools.partial(ff_resident_kernel, eps=eps),
                out_shape=jax.ShapeDtypeStruct((M, C), x.dtype),
                grid_spec=pltpu.PrefetchScalarGridSpec(
                    num_scalar_prefetch=0,
                    grid=(M // TL,),
                    in_specs=[
                        pl.BlockSpec((TL, C), lambda l: (l, 0)),   # x
                        pl.BlockSpec((1, C),  lambda l: (0, 0)),   # norm weight
                        pl.BlockSpec((C, H),  lambda l: (0, 0)),   # w1 resident
                        pl.BlockSpec((1, H),  lambda l: (0, 0)),   # b1
                        pl.BlockSpec((H, C),  lambda l: (0, 0)),   # w2 resident
                        pl.BlockSpec((1, C),  lambda l: (0, 0)),   # b2
                    ],
                    out_specs=pl.BlockSpec((TL, C), lambda l: (l, 0)),
                ),
                compiler_params=pltpu.CompilerParams(
                    dimension_semantics=("parallel",),
                    vmem_limit_bytes=_vmem_limit_bytes(need, vmem_cap)),
            )(*args)
            return out2.reshape(B, L, C)

    # ---------------- hidden-streaming path ----------------
    th_cands = _tile_candidates(H, mults=(128,))
    TH = next((t for t in th_cands if t <= th_target), th_cands[-1])

    TL = None
    for t in tl_cands:
        if t <= tl_target and _stream_vmem_bytes(t, TH, C, H, xb, wb) <= budget:
            TL = t
            break
    if TL is None:
        TL = tl_cands[-1]   # smallest candidate; best effort
    need = _stream_vmem_bytes(TL, TH, C, H, xb, wb)

    out2 = pl.pallas_call(
        functools.partial(ff_stream_kernel, eps=eps),
        out_shape=jax.ShapeDtypeStruct((M, C), x.dtype),
        grid_spec=pltpu.PrefetchScalarGridSpec(
            num_scalar_prefetch=0,
            grid=(M // TL, H // TH),
            in_specs=[
                pl.BlockSpec((TL, C), lambda l, h: (l, 0)),   # x
                pl.BlockSpec((1, C),  lambda l, h: (0, 0)),   # norm weight
                pl.BlockSpec((C, TH), lambda l, h: (0, h)),   # w1 slice
                pl.BlockSpec((1, TH), lambda l, h: (0, h)),   # b1 slice
                pl.BlockSpec((TH, C), lambda l, h: (h, 0)),   # w2 slice
                pl.BlockSpec((1, C),  lambda l, h: (0, 0)),   # b2
            ],
            out_specs=pl.BlockSpec((TL, C), lambda l, h: (l, 0)),
            scratch_shapes=[
                pltpu.VMEM((TL, C), jnp.bfloat16),   # normalized x (bf16)
                pltpu.VMEM((TL, C), jnp.float32),    # output accumulator
            ]),
        compiler_params=pltpu.CompilerParams(
            dimension_semantics=("parallel", "arbitrary"),
            vmem_limit_bytes=_vmem_limit_bytes(need, vmem_cap)),
    )(*args)
    return out2.reshape(B, L, C)


# --------------------------- pure-JAX reference (check) -----------------------

def _rms_ref(x, w, eps):
    return x * jax.lax.rsqrt(jnp.mean(x * x, axis=-1, keepdims=True) + eps) * w[0]


def feedforward_block_ref(x, p, *, eps=1e-6):
    xn = _rms_ref(x, p["norm_w"].astype(jnp.float32), eps).astype(jnp.bfloat16)
    h = jnp.dot(xn, p["w1"], preferred_element_type=jnp.float32) + p["b1"][0]
    h = jax.nn.gelu(h, approximate=True)
    out = jnp.dot(h.astype(jnp.bfloat16), p["w2"],
                  preferred_element_type=jnp.float32) + p["b2"][0]
    return x + out


# ------------------------------------ main ------------------------------------

def init_params(key, channels, expand):
    hidden = channels * expand
    k1, k2 = jax.random.split(key)
    n = lambda k, shape: (0.02 * jax.random.normal(k, shape)).astype(jnp.bfloat16)
    return {
        "norm_w": jnp.ones((1, channels), jnp.float32),
        "w1": n(k1, (channels, hidden)),
        "b1": jnp.zeros((1, hidden), jnp.float32),
        "w2": n(k2, (hidden, channels)),
        "b2": jnp.zeros((1, channels), jnp.float32),
    }


if __name__ == "__main__":
    def run_case(key, B, L, C, expand, **kw):
        kx, kp = jax.random.split(key)
        x = jax.random.normal(kx, (B, L, C), dtype=jnp.float32)
        params = init_params(kp, C, expand)
        out = jax.block_until_ready(feedforward_block(x, params, **kw))
        ref = feedforward_block_ref(x, params)
        assert out.shape == (B, L, C)
        err = float(jnp.max(jnp.abs(out - ref)))
        assert jnp.allclose(out, ref, atol=5e-3, rtol=5e-3), f"mismatch: {err}"

    key = jax.random.PRNGKey(0)
    k1, k2, k3 = jax.random.split(key, 3)
    # Tiny shape -> weights-resident path, single tile.
    run_case(k1, 2, 16, 32, 4)
    # Larger shape -> weights-resident path with a bigger sequence tile.
    run_case(k2, 2, 512, 128, 8)
    # Force the hidden-streaming (accumulator) path with multiple l/h tiles.
    run_case(k3, 2, 512, 128, 8, force_stream=True, tl_target=256, th_target=256)

    print("KERNEL_OK")
</pallas_src>

<mosaic_0001>
module attributes {stable_mosaic.version = 11 : i64} {
  func.func @ff_resident_kernel(%arg0: i32, %arg1: memref<32x32xf32, #tpu.memory_space<vmem>>, %arg2: memref<1x32xf32, #tpu.memory_space<vmem>>, %arg3: memref<32x128xbf16, #tpu.memory_space<vmem>>, %arg4: memref<1x128xf32, #tpu.memory_space<vmem>>, %arg5: memref<128x32xbf16, #tpu.memory_space<vmem>>, %arg6: memref<1x32xf32, #tpu.memory_space<vmem>>, %arg7: memref<32x32xf32, #tpu.memory_space<vmem>>) attributes {dimension_semantics = [#tpu.dimension_semantics<parallel>], iteration_bounds = array<i64: 1>, scalar_prefetch = 0 : i64, scratch_operands = 0 : i64, tpu.core_type = #tpu.core_type<tc>, window_params = [{transform_indices = @transform_0, window_bounds = array<i64: 32, 32>}, {pipeline_mode = #tpu.pipeline_mode<synchronous>, transform_indices = @transform_1, window_bounds = array<i64: 1, 32>}, {pipeline_mode = #tpu.pipeline_mode<synchronous>, transform_indices = @transform_2, window_bounds = array<i64: 32, 128>}, {pipeline_mode = #tpu.pipeline_mode<synchronous>, transform_indices = @transform_3, window_bounds = array<i64: 1, 128>}, {pipeline_mode = #tpu.pipeline_mode<synchronous>, transform_indices = @transform_4, window_bounds = array<i64: 128, 32>}, {pipeline_mode = #tpu.pipeline_mode<synchronous>, transform_indices = @transform_5, window_bounds = array<i64: 1, 32>}, {transform_indices = @transform_6, window_bounds = array<i64: 32, 32>}]} {
    %c0 = arith.constant 0 : index
    %c0_0 = arith.constant 0 : index
    %0 = vector.load %arg1[%c0, %c0_0] : memref<32x32xf32, #tpu.memory_space<vmem>>, vector<32x32xf32>
    %c0_1 = arith.constant 0 : index
    %c0_2 = arith.constant 0 : index
    %1 = vector.load %arg2[%c0_1, %c0_2] : memref<1x32xf32, #tpu.memory_space<vmem>>, vector<1x32xf32>
    %2 = arith.mulf %0, %0 : vector<32x32xf32>
    %cst = arith.constant dense<0.000000e+00> : vector<32xf32>
    %3 = vector.multi_reduction <add>, %2, %cst [1] : vector<32x32xf32> to vector<32xf32>
    %4 = vector.shape_cast %3 : vector<32xf32> to vector<32x1xf32>
    %cst_3 = arith.constant 3.200000e+01 : f32
    %5 = vector.broadcast %cst_3 : f32 to vector<32x1xf32>
    %6 = arith.divf %4, %5 : vector<32x1xf32>
    %cst_4 = arith.constant 9.99999997E-7 : f32
    %7 = vector.broadcast %cst_4 : f32 to vector<32x1xf32>
    %8 = arith.addf %6, %7 : vector<32x1xf32>
    %9 = math.rsqrt %8 : vector<32x1xf32>
    %10 = vector.broadcast %9 : vector<32x1xf32> to vector<32x32xf32>
    %11 = arith.mulf %0, %10 : vector<32x32xf32>
    %12 = vector.broadcast %1 : vector<1x32xf32> to vector<32x32xf32>
    %13 = arith.mulf %11, %12 : vector<32x32xf32>
    %14 = arith.truncf %13 : vector<32x32xf32> to vector<32x32xbf16>
    %c0_5 = arith.constant 0 : index
    %c0_6 = arith.constant 0 : index
    %15 = vector.load %arg3[%c0_5, %c0_6] : memref<32x128xbf16, #tpu.memory_space<vmem>>, vector<32x128xbf16>
    %cst_7 = arith.constant dense<0.000000e+00> : vector<32x128xf32>
    %16 = tpu.matmul %14, %15, %cst_7 {dimension_numbers = #tpu.dot_dimension_numbers<[1], [0], [0], [1], [0, 0, 1, 1], [], []>} : vector<32x32xbf16>, vector<32x128xbf16>, vector<32x128xf32> -> vector<32x128xf32>
    %c0_8 = arith.constant 0 : index
    %c0_9 = arith.constant 0 : index
    %17 = vector.load %arg4[%c0_8, %c0_9] : memref<1x128xf32, #tpu.memory_space<vmem>>, vector<1x128xf32>
    %18 = vector.broadcast %17 : vector<1x128xf32> to vector<32x128xf32>
    %19 = arith.addf %16, %18 : vector<32x128xf32>
    %20 = arith.mulf %19, %19 : vector<32x128xf32>
    %21 = arith.mulf %19, %20 : vector<32x128xf32>
    %cst_10 = arith.constant 4.471500e-02 : f32
    %22 = vector.broadcast %cst_10 : f32 to vector<32x128xf32>
    %23 = arith.mulf %22, %21 : vector<32x128xf32>
    %24 = arith.addf %19, %23 : vector<32x128xf32>
    %cst_11 = arith.constant 0.797884583 : f32
    %25 = vector.broadcast %cst_11 : f32 to vector<32x128xf32>
    %26 = arith.mulf %25, %24 : vector<32x128xf32>
    %27 = math.tanh %26 : vector<32x128xf32>
    %cst_12 = arith.constant 1.000000e+00 : f32
    %28 = vector.broadcast %cst_12 : f32 to vector<32x128xf32>
    %29 = arith.addf %28, %27 : vector<32x128xf32>
    %cst_13 = arith.constant 5.000000e-01 : f32
    %30 = vector.broadcast %cst_13 : f32 to vector<32x128xf32>
    %31 = arith.mulf %30, %29 : vector<32x128xf32>
    %32 = arith.mulf %19, %31 : vector<32x128xf32>
    %33 = arith.truncf %32 : vector<32x128xf32> to vector<32x128xbf16>
    %c0_14 = arith.constant 0 : index
    %c0_15 = arith.constant 0 : index
    %34 = vector.load %arg5[%c0_14, %c0_15] : memref<128x32xbf16, #tpu.memory_space<vmem>>, vector<128x32xbf16>
    %cst_16 = arith.constant dense<0.000000e+00> : vector<32x32xf32>
    %35 = tpu.matmul %33, %34, %cst_16 {dimension_numbers = #tpu.dot_dimension_numbers<[1], [0], [0], [1], [0, 0, 1, 1], [], []>} : vector<32x128xbf16>, vector<128x32xbf16>, vector<32x32xf32> -> vector<32x32xf32>
    %36 = arith.addf %0, %35 : vector<32x32xf32>
    %c0_17 = arith.constant 0 : index
    %c0_18 = arith.constant 0 : index
    %37 = vector.load %arg6[%c0_17, %c0_18] : memref<1x32xf32, #tpu.memory_space<vmem>>, vector<1x32xf32>
    %38 = vector.broadcast %37 : vector<1x32xf32> to vector<32x32xf32>
    %39 = arith.addf %36, %38 : vector<32x32xf32>
    %c0_19 = arith.constant 0 : index
    %c0_20 = arith.constant 0 : index
    %40 = vector.load %arg7[%c0_19, %c0_20] : memref<32x32xf32, #tpu.memory_space<vmem>>, vector<32x32xf32>
    tpu.vector_store %arg7[%c0_19, %c0_20], %39 {strides = array<i32>} : memref<32x32xf32, #tpu.memory_space<vmem>>, vector<32x32xf32>,
    return
  }
  func.func @transform_0(%arg0: i32) -> (i32, i32) {
    %c0_i32 = arith.constant 0 : i32
    %c0_i32_0 = arith.constant 0 : i32
    return %arg0, %c0_i32 : i32, i32
  }
  func.func @transform_1(%arg0: i32) -> (i32, i32) {
    %c0_i32 = arith.constant 0 : i32
    %c0_i32_0 = arith.constant 0 : i32
    %c0_i32_1 = arith.constant 0 : i32
    return %c0_i32, %c0_i32_0 : i32, i32
  }
  func.func @transform_2(%arg0: i32) -> (i32, i32) {
    %c0_i32 = arith.constant 0 : i32
    %c0_i32_0 = arith.constant 0 : i32
    %c0_i32_1 = arith.constant 0 : i32
    return %c0_i32, %c0_i32_0 : i32, i32
  }
  func.func @transform_3(%arg0: i32) -> (i32, i32) {
    %c0_i32 = arith.constant 0 : i32
    %c0_i32_0 = arith.constant 0 : i32
    %c0_i32_1 = arith.constant 0 : i32
    return %c0_i32, %c0_i32_0 : i32, i32
  }
  func.func @transform_4(%arg0: i32) -> (i32, i32) {
    %c0_i32 = arith.constant 0 : i32
    %c0_i32_0 = arith.constant 0 : i32
    %c0_i32_1 = arith.constant 0 : i32
    return %c0_i32, %c0_i32_0 : i32, i32
  }
  func.func @transform_5(%arg0: i32) -> (i32, i32) {
    %c0_i32 = arith.constant 0 : i32
    %c0_i32_0 = arith.constant 0 : i32
    %c0_i32_1 = arith.constant 0 : i32
    return %c0_i32, %c0_i32_0 : i32, i32
  }
  func.func @transform_6(%arg0: i32) -> (i32, i32) {
    %c0_i32 = arith.constant 0 : i32
    %c0_i32_0 = arith.constant 0 : i32
    return %arg0, %c0_i32 : i32, i32
  }
}

</mosaic_0001>

<llo_original>
// kernel: tpu_custom_call.1
$region0: #{tpu_custom_call.1}
  #allocation0 [shape = 'u32[]', space=smem, size = 0x4, offset = 0x4, fixed_abs, tag = 'smem constant byte address 0x4 - core index']
  #allocation1 [shape = 'u32[144,128]{1,0:T(1,128)}', space=vmem, size = 0x12000, scoped, tag = 'internal scratch']
  %s0 = inlined_call_operand.vmem [shape: f32[32,32], index: 0, kind: input, shape index: {}]
  %s1 = inlined_call_operand.vmem [shape: f32[1,32], index: 1, kind: input, shape index: {}]
  %s2 = inlined_call_operand.vmem [shape: bf16[32,128], index: 2, kind: input, shape index: {}]
  %s3 = inlined_call_operand.vmem [shape: f32[1,128], index: 3, kind: input, shape index: {}]
  %s4 = inlined_call_operand.vmem [shape: bf16[128,32], index: 4, kind: input, shape index: {}]
  %s5 = inlined_call_operand.vmem [shape: f32[1,32], index: 5, kind: input, shape index: {}]
  %s6 = inlined_call_operand.hbm [shape: f32[32,32], index: 6, kind: output, shape index: {}]
  %s7 = sld [smem:[#allocation0]]
  $region34: #{tpu_custom_call.1} parent=0
    _
  %s9 = ssub.s32 1, %s7
  %s10 = scalar_select 0, %s9, %s7
  $region1: #{tpu_custom_call.1} parent=0
    #allocation2 [shape = 'u8[16384]{0}', space=vmem, size = 0x4000, scoped, tag = 'output window, operand 0, single buffered']
    #allocation3 [shape = 's32[1]{0}', space=sflag, size = 0x4, scoped, tag = 'scoped memory for tpu_custom_call.1']
    %11 = vsyncpa [#allocation3], 0
    // Predicated region
    $region2: #{tpu_custom_call.1} parent=1 // pred_check
      _
    $region3: #{tpu_custom_call.1} parent=1 // pred_check_branch
      %13 = sbr.rel (0) target = $region5
    $region4: #{tpu_custom_call.1} parent=1 // pred_region
      _
    $region5: #{tpu_custom_call.1} parent=1 // pred_fallthru
      _
    // Predicated region
    $region6: #{tpu_custom_call.1} parent=1 // pred_check
      _
    $region7: #{tpu_custom_call.1} parent=1 // pred_check_branch
      %15 = sbr.rel (0) target = $region9
    $region8: #{tpu_custom_call.1} parent=1 // pred_region
      _
    $region9: #{tpu_custom_call.1} parent=1 // pred_fallthru
      _
    // Predicated region
    $region10: #{tpu_custom_call.1} parent=1 // pred_check
      _
    $region11: #{tpu_custom_call.1} parent=1 // pred_check_branch
      %17 = sbr.rel (0) target = $region13
    $region12: #{tpu_custom_call.1} parent=1 // pred_region
      _
    $region13: #{tpu_custom_call.1} parent=1 // pred_fallthru
      _
    // Predicated region
    $region14: #{tpu_custom_call.1} parent=1 // pred_check
      _
    $region15: #{tpu_custom_call.1} parent=1 // pred_check_branch
      %19 = sbr.rel (0) target = $region17
    $region16: #{tpu_custom_call.1} parent=1 // pred_region
      _
    $region17: #{tpu_custom_call.1} parent=1 // pred_fallthru
      _
    // Predicated region
    $region18: #{tpu_custom_call.1} parent=1 // pred_check
      _
    $region19: #{tpu_custom_call.1} parent=1 // pred_check_branch
      %21 = sbr.rel (0) target = $region21
    $region20: #{tpu_custom_call.1} parent=1 // pred_region
      _
    $region21: #{tpu_custom_call.1} parent=1 // pred_fallthru
      _
    // Predicated region
    $region22: #{tpu_custom_call.1} parent=1 // pred_check
      _
    $region23: #{tpu_custom_call.1} parent=1 // pred_check_branch
      %23 = sbr.rel (0) target = $region25
    $region24: #{tpu_custom_call.1} parent=1 // pred_region
      _
    $region25: #{tpu_custom_call.1} parent=1 // pred_fallthru
      _
    %v25 = vld [vmem:[%s0] sm:$0xff]
    %v26 = vld [vmem:[%s0 + $0x8] sm:$0xff]
    %v27 = vld [vmem:[%s0 + $0x10] sm:$0xff]
    %v28 = vld [vmem:[%s0 + $0x18] sm:$0xff]
    %v29 = vld [vmem:[%s1] sm:$0x1]
    %v30 = vmul.f32 %v25, %v25
    %v31 = vmul.f32 %v26, %v26
    %v32 = vmul.f32 %v27, %v27
    %v33 = vmul.f32 %v28, %v28
    %vm34 = vcmask 261120
    %v35 = vsel %vm34, %v30, 0.0
    %36 = vadd.xlane.f32.xlu0 %v35
    %v37 = vpop.xlane.xlu0 %36
    %v38 = vsel %vm34, %v31, 0.0
    %39 = vadd.xlane.f32.xlu0 %v38
    %v40 = vpop.xlane.xlu0 %39
    %v41 = vsel %vm34, %v32, 0.0
    %42 = vadd.xlane.f32.xlu0 %v41
    %v43 = vpop.xlane.xlu0 %42
    %v44 = vsel %vm34, %v33, 0.0
    %45 = vadd.xlane.f32.xlu0 %v44
    %v46 = vpop.xlane.xlu0 %45
    %v47 = vrcp.pop 32.0
    %v48 = vmul.f32 %v37, %v47
    %v49 = vmul.f32 %v40, %v47
    %v50 = vmul.f32 %v43, %v47
    %v51 = vmul.f32 %v46, %v47
    %v52 = vadd.f32 %v48, 1e-06
    %v53 = vadd.f32 %v49, 1e-06
    %v54 = vadd.f32 %v50, 1e-06
    %v55 = vadd.f32 %v51, 1e-06
    %v56 = vrsqrt.pop %v52
    %v57 = vrsqrt.pop %v53
    %v58 = vrsqrt.pop %v54
    %v59 = vrsqrt.pop %v55
    %v60 = vmul.f32 %v25, %v56
    %v61 = vmul.f32 %v26, %v57
    %v62 = vmul.f32 %v27, %v58
    %v63 = vmul.f32 %v28, %v59
    %v65 = vlaneseq
    %v66 = vshrl.u32 %v65, 7
    %v67 = vsub.s32 0, %v66
    %v68 = vrot.slane %v29, %v67
    %v70 = vmul.f32 %v60, %v68
    %v71 = vmul.f32 %v61, %v68
    %v72 = vmul.f32 %v62, %v68
    %v73 = vmul.f32 %v63, %v68
    %v74 = vpack.c.bf16 %v71, %v70
    %v75 = vpack.c.bf16 %v73, %v72
    %v76 = vld [vmem:[%s2] sm:$0xf]
    %v77 = vld [vmem:[%s2 + $0x4] sm:$0xf]
    %v78 = vld [vmem:[%s2 + $0x8] sm:$0xf]
    %v79 = vld [vmem:[%s2 + $0xc] sm:$0xf]
    %v80 = vld [vmem:[%s3] sm:$0x1]
    %v82 = vlaneseq
    %v83 = vshrl.u32 %v82, 7
    %v84 = vsub.s32 0, %v83
    %v85 = vrot.slane %v80, %v84
    %v91 = vunpack.c.l.b16 %v76
    %v92 = vunpack.c.l.b16 %v77
    %v93 = vunpack.c.l.b16 %v78
    %v94 = vunpack.c.l.b16 %v79
    %v95 = vpack.c.b16 %v92, %v91
    %v96 = vpack.c.b16 %v94, %v93
    %v100 = vsel %vm34, %v74, 0
    %v103 = vsel %vm34, %v75, 0
    %105 = vmatprep.subr.bf16.mxu0 0
    %106 = vmatpush1.bf16.msra.mxu0 0
    %107 = vmatprep.subr.bf16.mxu0 0
    %108 = vmatpush1.bf16.msra.mxu0 0
    %109 = vmatprep.subr.bf16.mxu0 0
    %110 = vmatpush1.bf16.msra.mxu0 0
    %111 = vmatprep.subr.bf16.mxu0 0
    %112 = vmatpush1.bf16.msra.mxu0 0
    %113 = vmatprep.subr.bf16.mxu0 0
    %114 = vmatpush1.bf16.msra.mxu0 0
    %115 = vmatprep.subr.bf16.mxu0 0
    %116 = vmatpush1.bf16.msra.mxu0 0
    %117 = vmatprep.subr.bf16.mxu0 0
    %118 = vmatpush1.bf16.msra.mxu0 %v96
    %119 = vmatprep.subr.bf16.mxu0 0
    %120 = vmatpush1.bf16.msra.mxu0 %v95
    %121 = vmatprep.subr.bf16.mxu0 0
    %122 = vmatpush2.bf16.msra.mxu0 0
    %123 = vmatprep.subr.bf16.mxu0 0
    %124 = vmatpush2.bf16.msra.mxu0 0
    %125 = vmatprep.subr.bf16.mxu0 0
    %126 = vmatpush2.bf16.msra.mxu0 0
    %127 = vmatprep.subr.bf16.mxu0 0
    %128 = vmatpush2.bf16.msra.mxu0 0
    %129 = vmatprep.subr.bf16.mxu0 0
    %130 = vmatpush2.bf16.msra.mxu0 0
    %131 = vmatprep.subr.bf16.mxu0 0
    %132 = vmatpush2.bf16.msra.mxu0 0
    %133 = vmatprep.subr.bf16.mxu0 0
    %134 = vmatpush2.bf16.msra.mxu0 0
    %135 = vmatprep.subr.bf16.mxu0 0
    %136 = vmatpush2.bf16.msra.mxu0 0
    %137 = vmatprep.mubr.bf16.mxu0 0
    %138 = vmatmul.mubr.bf16.gmra.mxu0 %v100
    %v139 = vpop.f32.mrf.mxu0
    %v140 = vadd.f32 %v85, %v139
    %v141 = vpop.f32.mrf.mxu0
    %v142 = vpop.f32.mrf.mxu0
    %v143 = vadd.f32 %v85, %v142
    %v144 = vpop.f32.mrf.mxu0
    %145 = vmatprep.mubr.bf16.mxu0 0
    %146 = vmatmul.mubr.bf16.gmra.mxu0 %v103
    %v147 = vpop.f32.mrf.mxu0
    %v148 = vadd.f32 %v85, %v147
    %v149 = vpop.f32.mrf.mxu0
    %v150 = vpop.f32.mrf.mxu0
    %v151 = vadd.f32 %v85, %v150
    %v152 = vpop.f32.mrf.mxu0
    %153 = vdwg.mxu0
    %v154 = vmul.f32 %v140, %v140
    %v155 = vmul.f32 %v143, %v143
    %v156 = vmul.f32 %v148, %v148
    %v157 = vmul.f32 %v151, %v151
    %v158 = vmul.f32 %v140, %v154
    %v159 = vmul.f32 %v143, %v155
    %v160 = vmul.f32 %v148, %v156
    %v161 = vmul.f32 %v151, %v157
    %v162 = vmul.f32 %v158, 0.044715
    %v163 = vmul.f32 %v159, 0.044715
    %v164 = vmul.f32 %v160, 0.044715
    %v165 = vmul.f32 %v161, 0.044715
    %v166 = vadd.f32 %v140, %v162
    %v167 = vadd.f32 %v143, %v163
    %v168 = vadd.f32 %v148, %v164
    %v169 = vadd.f32 %v151, %v165
    %v170 = vmul.f32 %v166, 0.7978846
    %v171 = vmul.f32 %v167, 0.7978846
    %v172 = vmul.f32 %v168, 0.7978846
    %v173 = vmul.f32 %v169, 0.7978846
    %v174 = vtanh.pop %v170
    %v175 = vtanh.pop %v171
    %v176 = vtanh.pop %v172
    %v177 = vtanh.pop %v173
    %v178 = vadd.f32 %v174, 1.0
    %v179 = vadd.f32 %v175, 1.0
    %v180 = vadd.f32 %v176, 1.0
    %v181 = vadd.f32 %v177, 1.0
    %v182 = vmul.f32 %v178, 0.5
    %v183 = vmul.f32 %v179, 0.5
    %v184 = vmul.f32 %v180, 0.5
    %v185 = vmul.f32 %v181, 0.5
    %v186 = vmul.f32 %v140, %v182
    %v187 = vmul.f32 %v143, %v183
    %v188 = vmul.f32 %v148, %v184
    %v189 = vmul.f32 %v151, %v185
    %v190 = vpack.c.bf16 %v187, %v186
    %v191 = vpack.c.bf16 %v189, %v188
    %v192 = vld [vmem:[%s4] sm:$0xf]
    %v193 = vld [vmem:[%s4 + $0x4] sm:$0xf]
    %v194 = vld [vmem:[%s4 + $0x8] sm:$0xf]
    %v195 = vld [vmem:[%s4 + $0xc] sm:$0xf]
    %v196 = vld [vmem:[%s4 + $0x10] sm:$0xf]
    %v197 = vld [vmem:[%s4 + $0x14] sm:$0xf]
    %v198 = vld [vmem:[%s4 + $0x18] sm:$0xf]
    %v199 = vld [vmem:[%s4 + $0x1c] sm:$0xf]
    %v200 = vld [vmem:[%s4 + $0x20] sm:$0xf]
    %v201 = vld [vmem:[%s4 + $0x24] sm:$0xf]
    %v202 = vld [vmem:[%s4 + $0x28] sm:$0xf]
    %v203 = vld [vmem:[%s4 + $0x2c] sm:$0xf]
    %v204 = vld [vmem:[%s4 + $0x30] sm:$0xf]
    %v205 = vld [vmem:[%s4 + $0x34] sm:$0xf]
    %v206 = vld [vmem:[%s4 + $0x38] sm:$0xf]
    %v207 = vld [vmem:[%s4 + $0x3c] sm:$0xf]
    %v224 = vunpack.c.l.b16 %v192
    %v225 = vunpack.c.l.b16 %v193
    %v226 = vunpack.c.l.b16 %v194
    %v227 = vunpack.c.l.b16 %v195
    %v228 = vunpack.c.l.b16 %v196
    %v229 = vunpack.c.l.b16 %v197
    %v230 = vunpack.c.l.b16 %v198
    %v231 = vunpack.c.l.b16 %v199
    %v232 = vunpack.c.l.b16 %v200
    %v233 = vunpack.c.l.b16 %v201
    %v234 = vunpack.c.l.b16 %v202
    %v235 = vunpack.c.l.b16 %v203
    %v236 = vunpack.c.l.b16 %v204
    %v237 = vunpack.c.l.b16 %v205
    %v238 = vunpack.c.l.b16 %v206
    %v239 = vunpack.c.l.b16 %v207
    %v240 = vpack.c.b16 %v225, %v224
    %v241 = vpack.c.b16 %v227, %v226
    %v242 = vpack.c.b16 %v229, %v228
    %v243 = vpack.c.b16 %v231, %v230
    %v244 = vpack.c.b16 %v233, %v232
    %v245 = vpack.c.b16 %v235, %v234
    %v246 = vpack.c.b16 %v237, %v236
    %v247 = vpack.c.b16 %v239, %v238
    %256 = vmatprep.subr.bf16.mxu0 0
    %257 = vmatpush1.bf16.msra.mxu0 %v247
    %258 = vmatprep.subr.bf16.mxu0 0
    %259 = vmatpush1.bf16.msra.mxu0 %v246
    %260 = vmatprep.subr.bf16.mxu0 0
    %261 = vmatpush1.bf16.msra.mxu0 %v245
    %262 = vmatprep.subr.bf16.mxu0 0
    %263 = vmatpush1.bf16.msra.mxu0 %v244
    %264 = vmatprep.subr.bf16.mxu0 0
    %265 = vmatpush1.bf16.msra.mxu0 %v243
    %266 = vmatprep.subr.bf16.mxu0 0
    %267 = vmatpush1.bf16.msra.mxu0 %v242
    %268 = vmatprep.subr.bf16.mxu0 0
    %269 = vmatpush1.bf16.msra.mxu0 %v241
    %270 = vmatprep.subr.bf16.mxu0 0
    %271 = vmatpush1.bf16.msra.mxu0 %v240
    %272 = vmatprep.subr.bf16.mxu0 0
    %273 = vmatpush2.bf16.msra.mxu0 0
    %274 = vmatprep.subr.bf16.mxu0 0
    %275 = vmatpush2.bf16.msra.mxu0 0
    %276 = vmatprep.subr.bf16.mxu0 0
    %277 = vmatpush2.bf16.msra.mxu0 0
    %278 = vmatprep.subr.bf16.mxu0 0
    %279 = vmatpush2.bf16.msra.mxu0 0
    %280 = vmatprep.subr.bf16.mxu0 0
    %281 = vmatpush2.bf16.msra.mxu0 0
    %282 = vmatprep.subr.bf16.mxu0 0
    %283 = vmatpush2.bf16.msra.mxu0 0
    %284 = vmatprep.subr.bf16.mxu0 0
    %285 = vmatpush2.bf16.msra.mxu0 0
    %286 = vmatprep.subr.bf16.mxu0 0
    %287 = vmatpush2.bf16.msra.mxu0 0
    %288 = vmatprep.mubr.bf16.mxu0 0
    %289 = vmatmul.mubr.bf16.gmra.mxu0 %v190
    %v290 = vpop.f32.mrf.mxu0
    %v291 = vadd.f32 0.0, %v290
    %v292 = vpop.f32.mrf.mxu0
    %v293 = vpop.f32.mrf.mxu0
    %v294 = vadd.f32 0.0, %v293
    %v295 = vpop.f32.mrf.mxu0
    %296 = vmatprep.mubr.bf16.mxu0 0
    %297 = vmatmul.mubr.bf16.gmra.mxu0 %v191
    %v298 = vpop.f32.mrf.mxu0
    %v299 = vadd.f32 0.0, %v298
    %v300 = vpop.f32.mrf.mxu0
    %v301 = vpop.f32.mrf.mxu0
    %v302 = vadd.f32 0.0, %v301
    %v303 = vpop.f32.mrf.mxu0
    %304 = vdwg.mxu0
    %v305 = vadd.f32 %v25, %v291
    %v306 = vadd.f32 %v26, %v294
    %v307 = vadd.f32 %v27, %v299
    %v308 = vadd.f32 %v28, %v302
    %v309 = vld [vmem:[%s5] sm:$0x1]
    %v311 = vlaneseq
    %v312 = vshrl.u32 %v311, 7
    %v313 = vsub.s32 0, %v312
    %v314 = vrot.slane %v309, %v313
    %v316 = vadd.f32 %v305, %v314
    %v317 = vadd.f32 %v306, %v314
    %v318 = vadd.f32 %v307, %v314
    %v319 = vadd.f32 %v308, %v314
    %320 = vst.msk [vmem:[#allocation2] sm:$0xff] %vm34, %v316
    %321 = vst.msk [vmem:[#allocation2 + $0x8] sm:$0xff] %vm34, %v317
    %322 = vst.msk [vmem:[#allocation2 + $0x10] sm:$0xff] %vm34, %v318
    %323 = vst.msk [vmem:[#allocation2 + $0x18] sm:$0xff] %vm34, %v319
    // Predicated region
    $region26: #{tpu_custom_call.1} parent=1 // pred_check
      _
    $region27: #{tpu_custom_call.1} parent=1 // pred_check_branch
      %325 = sbr.rel (0) target = $region29
    $region28: #{tpu_custom_call.1} parent=1 // pred_region
      %s327 = ssub.s32 512, 512
      %328 = vsyncadd [#allocation3], %s327
      %s329 = sshll.u32 [#allocation2], 4
      %s330 = int_to_ptr.vmem [resolvable:$true] %s329
      %335 = dma.vmem_to_hbm [thread:$0]  %s330, 512, %s6, [#allocation3], 128, 128, 8
    $region29: #{tpu_custom_call.1} parent=1 // pred_fallthru
      _
    // Predicated region
    $region30: #{tpu_custom_call.1} parent=1 // pred_check
      _
    $region31: #{tpu_custom_call.1} parent=1 // pred_check_branch
      %337 = sbr.rel (0) target = $region33
    $region32: #{tpu_custom_call.1} parent=1 // pred_region
      %338 = dma.done [#allocation3], 512
    $region33: #{tpu_custom_call.1} parent=1 // pred_fallthru
      _
    %339 = vsyncpa [#allocation3], 1

</llo_original>
